<compile_context>
chip_gen: v5e
topology: v5e:2x2
jax: 0.10.0
libtpu: 0.0.40
codegen_flags: <defaults>
</compile_context>

<pallas_src>
import functools

import jax
import jax.numpy as jnp
from jax import lax
from jax.experimental import pallas as pl
from jax.experimental.pallas import tpu as pltpu


# Taps in (dy, dx) row-major order; must match the im2col weight flattening.
_TAPS = tuple((dy, dx) for dy in (-1, 0, 1) for dx in (-1, 0, 1))


def _group_mean(v, num_groups):
    """v: (C, 1) per-channel statistic -> (C, 1) where every channel holds its
    group's mean (contiguous channel groups, PyTorch GroupNorm convention)."""
    C = v.shape[0]
    if num_groups == 1:
        m = jnp.mean(v, axis=0, keepdims=True)                 # (1, 1)
        return jnp.broadcast_to(m, (C, 1))
    cg = C // num_groups
    vg = v.reshape(num_groups, cg)                             # (G, cg)
    m = jnp.mean(vg, axis=1, keepdims=True)                    # (G, 1)
    return jnp.broadcast_to(m, (num_groups, cg)).reshape(C, 1)


def _extractor_kernel(*refs, H, W, group_sizes, eps, jnp_roll_sign):
    """Whole Extractor forward for one batch element, fully resident in VMEM.

    Ref layout (all weight refs are broadcast across the grid):
      x_ref                         (1, C_im, H*W)
      w_in_ref, b_in_ref            (C0, C_im), (C0, 1)
      per conv layer l:             w_flat (Cout, 9*Cin), b, gamma, beta  (Cout, 1)
      msg_w_ref, msg_b_ref          (M, M), (M, 1)
      o_ref                         (1, M, 1)
    """
    n_layers = len(group_sizes)
    x_ref = refs[0]
    w_in_ref, b_in_ref = refs[1], refs[2]
    layer_refs = refs[3:3 + 4 * n_layers]
    msg_w_ref, msg_b_ref = refs[3 + 4 * n_layers], refs[4 + 4 * n_layers]
    o_ref = refs[5 + 4 * n_layers]

    HW = H * W
    x = x_ref[0]                                               # (C_im, HW)

    # in_layer: 1x1 conv == channel-mixing matmul, folded into the fused kernel.
    act = (jnp.dot(w_in_ref[...], x, preferred_element_type=jnp.float32)
           + b_in_ref[...])                                    # (C0, HW)

    # Per-tap validity masks (replace zero padding); shared by every conv layer.
    col = lax.broadcasted_iota(jnp.int32, (1, HW), 1)
    hh = col // W
    ww = col % W
    tap_masks = []
    for dy, dx in _TAPS:
        valid = ((hh + dy >= 0) & (hh + dy < H)
                 & (ww + dx >= 0) & (ww + dx < W))
        tap_masks.append(valid.astype(jnp.float32))            # (1, HW)

    for li in range(n_layers):
        w_ref, b_ref, g_ref, bt_ref = layer_refs[4 * li:4 * li + 4]

        # im2col: 9 rolled+masked copies stacked on the (sublane) channel axis.
        # Wrapped lane positions are exactly the masked (out-of-image) ones.
        pieces = []
        for t, (dy, dx) in enumerate(_TAPS):
            s = dy * W + dx                                    # flat spatial offset
            if s == 0:
                shifted = act
            else:
                shifted = pltpu.roll(act, shift=(jnp_roll_sign * -s) % HW, axis=1)
            pieces.append(shifted * tap_masks[t])
        patches = jnp.concatenate(pieces, axis=0)              # (9*Cin, HW)

        # Conv 3x3 (padding=1) as ONE lane-dense matmul on the MXU.
        acc = (jnp.dot(w_ref[...], patches, preferred_element_type=jnp.float32)
               + b_ref[...])                                   # (Cout, HW)

        # GroupNorm (centered two-pass, biased variance) + affine + SiLU.
        ch_mean = jnp.mean(acc, axis=1, keepdims=True)         # (Cout, 1)
        gmean = _group_mean(ch_mean, group_sizes[li])
        centered = acc - gmean
        ch_ms = jnp.mean(centered * centered, axis=1, keepdims=True)
        gvar = _group_mean(ch_ms, group_sizes[li])
        y = centered * lax.rsqrt(gvar + eps)
        y = y * g_ref[...] + bt_ref[...]
        act = y * jax.nn.sigmoid(y)                            # SiLU

    # AdaptiveAvgPool2d((1,1)) + message Linear, fused epilogue.
    pooled = jnp.mean(act, axis=1, keepdims=True)              # (M, 1)
    out = (jnp.dot(msg_w_ref[...], pooled, preferred_element_type=jnp.float32)
           + msg_b_ref[...])                                   # (M, 1)
    o_ref[0] = out


def _roll_sign_probe():
    """Probe pltpu.roll's rotation sign once so the kernel's static shift
    amounts are correct regardless of convention."""
    def k(x_ref, o_ref):
        o_ref[...] = pltpu.roll(x_ref[...], shift=1, axis=1)

    x = jnp.arange(8 * 128, dtype=jnp.float32).reshape(8, 128)
    y = pl.pallas_call(k, out_shape=jax.ShapeDtypeStruct((8, 128), jnp.float32))(x)
    return 1 if bool(jnp.allclose(y, jnp.roll(x, 1, axis=1))) else -1


# ---------------------------------------------------------------------------
# Parameter init (deterministic, PyTorch-like uniform(+-1/sqrt(fan_in)))
# ---------------------------------------------------------------------------
def _init_conv(key, cout, cin, kh, kw):
    fan_in = cin * kh * kw
    bound = 1.0 / (fan_in ** 0.5)
    k1, k2 = jax.random.split(key)
    w = jax.random.uniform(k1, (cout, cin, kh, kw), jnp.float32, -bound, bound)
    b = jax.random.uniform(k2, (cout,), jnp.float32, -bound, bound)
    return w, b


def _init_linear(key, cout, cin):
    bound = 1.0 / (cin ** 0.5)
    k1, k2 = jax.random.split(key)
    w = jax.random.uniform(k1, (cout, cin), jnp.float32, -bound, bound)
    b = jax.random.uniform(k2, (cout,), jnp.float32, -bound, bound)
    return w, b


class ExtractorPallas:
    """Extractor as a single fused Pallas TPU kernel, grid=(batch,)."""

    def __init__(self, channels, depth, message_length, im_channels,
                 num_groups, key, eps=1e-5):
        self.eps = float(eps)
        self.message_length = message_length
        self.im_channels = im_channels
        keys = jax.random.split(key, depth + 2)

        # in_layer: Conv2d(im_channels -> channels[0], kernel_size=1)
        self.in_w_oihw, self.in_b = _init_conv(keys[0], channels[0],
                                               im_channels, 1, 1)

        # ConvGroupSiLU stack: (depth-1) layers with num_groups, then the
        # out_layer conv (-> message_length) with num_groups=1.
        specs = [(channels[i], channels[i + 1], num_groups)
                 for i in range(depth - 1)]
        specs.append((channels[-1], message_length, 1))
        self.conv_layers = []
        for li, (cin, cout, g) in enumerate(specs):
            w, b = _init_conv(keys[1 + li], cout, cin, 3, 3)
            self.conv_layers.append(dict(
                w_oihw=w, b=b,
                gamma=jnp.ones((cout,), jnp.float32),   # GroupNorm defaults
                beta=jnp.zeros((cout,), jnp.float32),
                groups=g))

        # message_layer: Linear(message_length -> message_length)
        self.msg_w, self.msg_b = _init_linear(keys[depth + 1],
                                              message_length, message_length)

        self._roll_sign = _roll_sign_probe()

    @staticmethod
    def _im2col_weight(w_oihw):
        cout, cin = w_oihw.shape[:2]
        # (O, I, KH, KW) -> (O, KH, KW, I) -> (O, 9*I); column = tap*Cin + ci
        return jnp.transpose(w_oihw, (0, 2, 3, 1)).reshape(cout, 9 * cin)

    def __call__(self, x_nchw):
        B, C, H, W = x_nchw.shape
        assert C == self.im_channels
        HW = H * W
        M = self.message_length

        x = x_nchw.reshape(B, C, HW)        # contiguous reshape, free in XLA

        args = [x,
                self.in_w_oihw.reshape(self.in_w_oihw.shape[0], C),
                self.in_b.reshape(-1, 1)]
        in_specs = [
            pl.BlockSpec((1, C, HW), lambda b: (b, 0, 0)),
            pl.BlockSpec(args[1].shape, lambda b: (0, 0)),
            pl.BlockSpec(args[2].shape, lambda b: (0, 0)),
        ]
        group_sizes = []
        for lyr in self.conv_layers:
            w_flat = self._im2col_weight(lyr["w_oihw"])
            for a in (w_flat, lyr["b"].reshape(-1, 1),
                      lyr["gamma"].reshape(-1, 1), lyr["beta"].reshape(-1, 1)):
                args.append(a)
                in_specs.append(pl.BlockSpec(a.shape, lambda b: (0, 0)))
            group_sizes.append(lyr["groups"])
        for a in (self.msg_w, self.msg_b.reshape(-1, 1)):
            args.append(a)
            in_specs.append(pl.BlockSpec(a.shape, lambda b: (0, 0)))

        kernel = functools.partial(
            _extractor_kernel, H=H, W=W, group_sizes=tuple(group_sizes),
            eps=self.eps, jnp_roll_sign=self._roll_sign)

        out = pl.pallas_call(
            kernel,
            out_shape=jax.ShapeDtypeStruct((B, M, 1), jnp.float32),
            grid=(B,),
            in_specs=in_specs,
            out_specs=pl.BlockSpec((1, M, 1), lambda b: (b, 0, 0)),
            compiler_params=pltpu.CompilerParams(
                dimension_semantics=("parallel",)),
        )(*args)
        return out.reshape(B, M)


# ---------------------------------------------------------------------------
# Pure-JAX reference (XLA conv / GN / SiLU) for correctness validation.
# ---------------------------------------------------------------------------
def _reference_forward(model, x_nchw):
    hp = lax.Precision.HIGHEST
    dn = ("NCHW", "OIHW", "NCHW")
    y = lax.conv_general_dilated(x_nchw, model.in_w_oihw, (1, 1), "VALID",
                                 dimension_numbers=dn, precision=hp)
    y = y + model.in_b[None, :, None, None]
    for lyr in model.conv_layers:
        y = lax.conv_general_dilated(y, lyr["w_oihw"], (1, 1),
                                     ((1, 1), (1, 1)),
                                     dimension_numbers=dn, precision=hp)
        y = y + lyr["b"][None, :, None, None]
        B, Cc, H, W = y.shape
        g = lyr["groups"]
        yg = y.reshape(B, g, Cc // g, H, W)
        mean = jnp.mean(yg, axis=(2, 3, 4), keepdims=True)
        var = jnp.mean((yg - mean) ** 2, axis=(2, 3, 4), keepdims=True)
        y = ((yg - mean) * lax.rsqrt(var + model.eps)).reshape(B, Cc, H, W)
        y = y * lyr["gamma"][None, :, None, None] + lyr["beta"][None, :, None, None]
        y = y * jax.nn.sigmoid(y)
    pooled = jnp.mean(y, axis=(2, 3))                         # (B, M)
    return jnp.dot(pooled, model.msg_w.T, precision=hp) + model.msg_b[None, :]


if __name__ == "__main__":
    # Small, deterministic config consistent with the module's constructor.
    channels = [8, 16]
    depth = 2
    message_length = 8
    im_channels = 3
    num_groups = 4
    B, H, W = 2, 16, 16

    key = jax.random.PRNGKey(0)
    kx, kp = jax.random.split(key)
    x = jax.random.normal(kx, (B, im_channels, H, W), jnp.float32)  # NCHW

    model = ExtractorPallas(channels, depth, message_length, im_channels,
                            num_groups, kp)
    out = jax.block_until_ready(model(x))
    assert out.shape == (B, message_length), out.shape
    assert bool(jnp.all(jnp.isfinite(out)))

    ref = jax.block_until_ready(_reference_forward(model, x))
    max_err = float(jnp.max(jnp.abs(out - ref)))
    assert bool(jnp.allclose(out, ref, rtol=2e-3, atol=2e-3)), max_err
    print("KERNEL_OK")
</pallas_src>

<mosaic_0001>
module attributes {stable_mosaic.version = 11 : i64} {
  func.func @k(%arg0: memref<8x128xf32, #tpu.memory_space<vmem>>, %arg1: memref<8x128xf32, #tpu.memory_space<vmem>>) attributes {dimension_semantics = [], scalar_prefetch = 0 : i64, scratch_operands = 0 : i64, tpu.core_type = #tpu.core_type<tc>} {
    %c0 = arith.constant 0 : index
    %c0_0 = arith.constant 0 : index
    %0 = vector.load %arg0[%c0, %c0_0] : memref<8x128xf32, #tpu.memory_space<vmem>>, vector<8x128xf32>
    %c1_i32 = arith.constant 1 : i32
    %1 = tpu.dynamic_rotate %0 by %c1_i32 dim 1 : vector<8x128xf32>, i32 -> vector<8x128xf32>
    %c0_1 = arith.constant 0 : index
    %c0_2 = arith.constant 0 : index
    %2 = vector.load %arg1[%c0_1, %c0_2] : memref<8x128xf32, #tpu.memory_space<vmem>>, vector<8x128xf32>
    tpu.vector_store %arg1[%c0_1, %c0_2], %1 {strides = array<i32>} : memref<8x128xf32, #tpu.memory_space<vmem>>, vector<8x128xf32>,
    return
  }
}

</mosaic_0001>

<llo_original>
// kernel: tpu_custom_call.1
$region0: #{tpu_custom_call.1}
  #allocation0 [shape = 'u32[]', space=smem, size = 0x4, offset = 0x4, fixed_abs, tag = 'smem constant byte address 0x4 - core index']
  #allocation1 [shape = 'u32[72,128]{1,0:T(1,128)}', space=vmem, size = 0x9000, scoped, tag = 'internal scratch']
  %s0 = inlined_call_operand.hbm [shape: f32[8,128], index: 0, kind: input, shape index: {}]
  %s1 = inlined_call_operand.hbm [shape: f32[8,128], index: 1, kind: output, shape index: {}]
  %s2 = sld [smem:[#allocation0]]
  $region18: #{tpu_custom_call.1} parent=0
    _
  %s4 = ssub.s32 1, %s2
  %s5 = scalar_select 0, %s4, %s2
  $region1: #{tpu_custom_call.1} parent=0
    #allocation2 [shape = 'u8[4096]{0}', space=vmem, size = 0x1000, scoped, tag = 'input window, operand 0, single buffered']
    #allocation3 [shape = 's32[1]{0}', space=sflag, size = 0x4, scoped, tag = 'scoped memory for tpu_custom_call.1']
    #allocation4 [shape = 's32[1]{0}', space=sflag, size = 0x4, scoped, tag = 'scoped memory for tpu_custom_call.1']
    #allocation5 [shape = 'u8[4096]{0}', space=vmem, size = 0x1000, scoped, tag = 'output window, operand 0, single buffered']
    %6 = vsyncpa [#allocation3], 0
    %7 = vsyncpa [#allocation4], 0
    // Predicated region
    $region2: #{tpu_custom_call.1} parent=1 // pred_check
      _
    $region3: #{tpu_custom_call.1} parent=1 // pred_check_branch
      %9 = sbr.rel (0) target = $region5
    $region4: #{tpu_custom_call.1} parent=1 // pred_region
      %11 = vsyncadd [#allocation3], 0
      %s13 = sshll.u32 %s0, 4
      %s14 = int_to_ptr.hbm [resolvable:$true] %s13
      %s15 = sshll.u32 [#allocation2], 4
      %s16 = int_to_ptr.vmem [resolvable:$true] %s15
      %18 = dma.hbm_to_vmem [thread:$0]  %s14, 128, %s16, [#allocation3]
    $region5: #{tpu_custom_call.1} parent=1 // pred_fallthru
      _
    // Predicated region
    $region6: #{tpu_custom_call.1} parent=1 // pred_check
      _
    $region7: #{tpu_custom_call.1} parent=1 // pred_check_branch
      %20 = sbr.rel (0) target = $region9
    $region8: #{tpu_custom_call.1} parent=1 // pred_region
      %22 = dma.done [#allocation3], 128
    $region9: #{tpu_custom_call.1} parent=1 // pred_fallthru
      _
    %v23 = vld [vmem:[#allocation2] sm:$0xff]
    %24 = vrot.lane.b32.xlu0 %v23, 1
    %v25 = vpop.permute.xlu0 %24
    %26 = vst [vmem:[#allocation5] sm:$0xff] %v25
    // Predicated region
    $region10: #{tpu_custom_call.1} parent=1 // pred_check
      _
    $region11: #{tpu_custom_call.1} parent=1 // pred_check_branch
      %28 = sbr.rel (0) target = $region13
    $region12: #{tpu_custom_call.1} parent=1 // pred_region
      %30 = vsyncadd [#allocation4], 0
      %s32 = sshll.u32 [#allocation5], 4
      %s33 = int_to_ptr.vmem [resolvable:$true] %s32
      %s34 = sshll.u32 %s1, 4
      %s35 = int_to_ptr.hbm [resolvable:$true] %s34
      %37 = dma.vmem_to_hbm [thread:$0]  %s33, 128, %s35, [#allocation4]
    $region13: #{tpu_custom_call.1} parent=1 // pred_fallthru
      _
    // Predicated region
    $region14: #{tpu_custom_call.1} parent=1 // pred_check
      _
    $region15: #{tpu_custom_call.1} parent=1 // pred_check_branch
      %39 = sbr.rel (0) target = $region17
    $region16: #{tpu_custom_call.1} parent=1 // pred_region
      %41 = dma.done [#allocation4], 128
    $region17: #{tpu_custom_call.1} parent=1 // pred_fallthru
      _
    %42 = vsyncpa [#allocation3], 1
    %43 = vsyncpa [#allocation4], 1

</llo_original>
